<compile_context>
chip_gen: v7x
topology: tpu7x:2x2x1
jax: 0.10.0
libtpu: 0.0.40
codegen_flags: <defaults>
</compile_context>

<pallas_src>
import functools

import jax
import jax.numpy as jnp
import numpy as np
from jax.experimental import pallas as pl
from jax.experimental.pallas import tpu as pltpu


# ---------------------------------------------------------------------------
# Kernel 1: lane-dense channel reduction   x:(B,C,HW) -> feats:(B,2,HW) f32
# ---------------------------------------------------------------------------
def _channel_reduce_kernel(x_ref, o_ref, sum_ref, max_ref, *,
                           chunk, n_chunks, unroll, inv_c, tc, c_rem):
    c_step = pl.program_id(2)
    last_c = pl.num_programs(2) - 1

    @pl.when(c_step == 0)
    def _init():
        sum_ref[...] = jnp.zeros(sum_ref.shape, sum_ref.dtype)
        max_ref[...] = jnp.full(max_ref.shape, -jnp.inf, max_ref.dtype)

    masked = c_rem != 0            # static: only the last channel block is ragged
    if masked:
        valid = jnp.where(c_step == last_c, c_rem, tc)

    def body(ci, carry):
        start = pl.multiple_of(ci * chunk, chunk)
        xb = x_ref[0, pl.ds(start, chunk), :].astype(jnp.float32)
        if masked:
            ch = start + jax.lax.broadcasted_iota(jnp.int32, (chunk, 1), 0)
            ok = ch < valid
            xs = jnp.where(ok, xb, 0.0)
            xm = jnp.where(ok, xb, -jnp.inf)
        else:
            xs = xm = xb
        sum_ref[...] = sum_ref[...] + jnp.sum(xs, axis=0, keepdims=True)
        max_ref[...] = jnp.maximum(max_ref[...],
                                   jnp.max(xm, axis=0, keepdims=True))
        return carry

    jax.lax.fori_loop(0, n_chunks, body, 0, unroll=unroll)

    @pl.when(c_step == last_c)
    def _finalize():
        o_ref[0, 0, :] = sum_ref[0, :] * inv_c      # exact mean: sum * (1/C)
        o_ref[0, 1, :] = max_ref[0, :]


# ---------------------------------------------------------------------------
# Kernel 2: once-per-batch 3x3 'SAME' conv (as shift-matrix matmuls) + sigmoid
# ---------------------------------------------------------------------------
def _conv_sigmoid_kernel(f_ref, srow_ref, mcol_ref, o_ref):
    kh = srow_ref.shape[0]                         # static kernel height
    avg = f_ref[0, 0]                              # (H, W) f32
    mxv = f_ref[0, 1]
    hi = jax.lax.Precision.HIGHEST                 # exact-f32 conv output
    res = None
    for i in range(kh):                            # unrolled over kernel rows
        inner = (jnp.dot(avg, mcol_ref[0, i], precision=hi,
                         preferred_element_type=jnp.float32)
                 + jnp.dot(mxv, mcol_ref[1, i], precision=hi,
                           preferred_element_type=jnp.float32))
        term = jnp.dot(srow_ref[i], inner, precision=hi,
                       preferred_element_type=jnp.float32)
        res = term if res is None else res + term
    o_ref[0, 0] = jax.nn.sigmoid(res).astype(o_ref.dtype)


# ---------------------------------------------------------------------------
# Helpers
# ---------------------------------------------------------------------------
def _round_up(a, b):
    return (a + b - 1) // b * b


def _build_conv_matrices(w_conv, H, W):
    """Row-shift (S) and column-band (M) matrices for the zero-padded conv.

    out = sum_i S_i @ (avg @ M[0, i] + mx @ M[1, i]) == the k x k 'SAME'
    cross-correlation Conv2d(2, 1, k, padding=k//2, bias=False) of [avg, mx].
    """
    w = np.asarray(w_conv, dtype=np.float32)[0]            # (2, kh, kw)
    kh, kw = w.shape[1], w.shape[2]
    ph, pw = kh // 2, kw // 2

    srow = np.zeros((kh, H, H), np.float32)                # (S_d @ m)[h] = m[h+d]
    for i in range(kh):
        d = i - ph
        for h in range(H):
            r = h + d
            if 0 <= r < H:
                srow[i, h, r] = 1.0

    mcol = np.zeros((2, kh, W, W), np.float32)             # column bands
    for c in range(2):
        for i in range(kh):
            for j in range(kw):
                d = j - pw
                for col in range(W):
                    src = col + d
                    if 0 <= src < W:
                        mcol[c, i, src, col] += w[c, i, j]

    return jnp.asarray(srow), jnp.asarray(mcol)


def _vmem_budget():
    """Per-generation (input-block budget, vmem_limit_bytes); v7x-safe fallback."""
    cap = 64 * 1024 * 1024                     # smallest per-TC VMEM (v7x)
    try:
        info = pltpu.get_tpu_info()
        cap_attr = getattr(info, "vmem_capacity_bytes", None)
        if cap_attr:
            cap = int(cap_attr)
    except Exception:
        pass
    input_budget = min(cap // 5, 16 * 1024 * 1024)
    vmem_limit = max(32 * 1024 * 1024, min(cap * 3 // 4, 96 * 1024 * 1024))
    return input_budget, int(vmem_limit)


def _pick_hw_tile(HW, C, itemsize):
    """Lane-dense spatial tile: multiple of 128 dividing HW (or full HW)."""
    if HW % 128 != 0:
        return HW                               # full-extent last dim (legal)
    # Aim for ~2 MiB streamed blocks assuming all of C fits in one channel tile.
    target = max(128, (2 * 1024 * 1024) // max(1, _round_up(C, 8) * itemsize))
    target = _round_up(min(target, HW), 128)
    best, t = 128, 128
    while t <= HW:
        if HW % t == 0 and t <= target:
            best = t
        t += 128
    # Keep >= 2 spatial tiles when possible so v7x's 2nd TensorCore has work.
    if best == HW and HW >= 256 and (HW // 2) % 128 == 0:
        best = HW // 2
    return best


def _pick_channel_tile(C, hw_tile, itemsize, budget_bytes, *,
                       chunk=8, max_channel_tile=None):
    """Largest channel tile (multiple of `chunk`) whose double-buffered input
    block fits the budget, accounting for lane padding and sublane packing."""
    lane_bytes = _round_up(hw_tile, 128) * itemsize
    pack = max(8, 32 // max(1, itemsize))          # f32:8, bf16:16, int8:32
    tc = budget_bytes // (2 * lane_bytes)          # 2 pipeline buffers
    tc = max(chunk, (tc // pack) * pack)
    tc = min(tc, _round_up(C, chunk))
    if max_channel_tile is not None:
        tc = min(tc, max(chunk, _round_up(max_channel_tile, chunk)))
    return tc


# ---------------------------------------------------------------------------
# Wrapper
# ---------------------------------------------------------------------------
def spatial_attention(x, w_conv, *, max_channel_tile=None):
    """x: (B, C, H, W) float; w_conv: (1, 2, kh, kw) conv weight (OIHW)."""
    B, C, H, W = x.shape
    HW = H * W
    itemsize = jnp.dtype(x.dtype).itemsize
    input_budget, vmem_limit = _vmem_budget()

    hw_tile = _pick_hw_tile(HW, C, itemsize)
    n_hw = HW // hw_tile
    tc = _pick_channel_tile(C, hw_tile, itemsize, input_budget,
                            max_channel_tile=max_channel_tile)
    n_c = pl.cdiv(C, tc)
    c_rem = C % tc
    chunk = min(8, tc)
    n_chunks = tc // chunk
    unroll = n_chunks <= 8

    x2 = x.reshape(B, C, HW)                       # free: NCHW is contiguous

    reduce_kernel = functools.partial(
        _channel_reduce_kernel, chunk=chunk, n_chunks=n_chunks, unroll=unroll,
        inv_c=1.0 / float(C), tc=tc, c_rem=c_rem)

    feats = pl.pallas_call(
        reduce_kernel,
        grid=(B, n_hw, n_c),
        in_specs=[pl.BlockSpec((1, tc, hw_tile), lambda b, h, c: (b, c, h))],
        out_specs=pl.BlockSpec((1, 2, hw_tile), lambda b, h, c: (b, 0, h)),
        out_shape=jax.ShapeDtypeStruct((B, 2, HW), jnp.float32),
        scratch_shapes=[pltpu.VMEM((1, hw_tile), jnp.float32),   # running sum
                        pltpu.VMEM((1, hw_tile), jnp.float32)],  # running max
        compiler_params=pltpu.CompilerParams(
            dimension_semantics=("parallel", "parallel", "arbitrary"),
            vmem_limit_bytes=vmem_limit),
    )(x2)

    feats = feats.reshape(B, 2, H, W)              # free: contiguous

    srow, mcol = _build_conv_matrices(w_conv, H, W)
    out = pl.pallas_call(
        _conv_sigmoid_kernel,
        grid=(B,),
        in_specs=[
            pl.BlockSpec((1, 2, H, W), lambda b: (b, 0, 0, 0)),
            # Constant conv matrices: constant index_map -> single DMA,
            # VMEM-resident only for this short per-batch kernel.
            pl.BlockSpec(srow.shape, lambda b: (0, 0, 0)),
            pl.BlockSpec(mcol.shape, lambda b: (0, 0, 0, 0)),
        ],
        out_specs=pl.BlockSpec((1, 1, H, W), lambda b: (b, 0, 0, 0)),
        out_shape=jax.ShapeDtypeStruct((B, 1, H, W), x.dtype),
        compiler_params=pltpu.CompilerParams(
            dimension_semantics=("parallel",),
            vmem_limit_bytes=vmem_limit),
    )(feats, srow, mcol)
    return out


# ---------------------------------------------------------------------------
# Pure-JAX reference and self-test
# ---------------------------------------------------------------------------
def _reference(x, w_conv):
    xf = x.astype(jnp.float32)
    B, C, H, W = xf.shape
    avg = jnp.mean(xf, axis=1)
    mx = jnp.max(xf, axis=1)
    feats = jnp.stack([avg, mx], axis=1)                    # (B, 2, H, W)
    kh, kw = w_conv.shape[2], w_conv.shape[3]
    ph, pw = kh // 2, kw // 2
    padded = jnp.pad(feats, ((0, 0), (0, 0), (ph, ph), (pw, pw)))
    out = jnp.zeros((B, H, W), jnp.float32)
    for c in range(2):
        for i in range(kh):
            for j in range(kw):
                out = out + w_conv[0, c, i, j] * padded[:, c, i:i + H, j:j + W]
    return jax.nn.sigmoid(out)[:, None, :, :]


if __name__ == "__main__":
    key = jax.random.PRNGKey(0)
    k1, k2, k3 = jax.random.split(key, 3)

    # Conv2d(2, 1, 3, padding=1, bias=False) weight, OIHW = (1, 2, 3, 3).
    w_conv = jax.random.normal(k2, (1, 2, 3, 3), dtype=jnp.float32) * 0.3

    # Test 1: exercises multi-step channel reduction (2 channel tiles) and the
    # 2-way spatial ("parallel") split; grid = (2, 2, 2).
    B, C, H, W = 2, 16, 16, 16
    x = jax.random.normal(k1, (B, C, H, W), dtype=jnp.float32)
    out = jax.block_until_ready(spatial_attention(x, w_conv, max_channel_tile=8))
    ref = _reference(x, w_conv)
    assert out.shape == (B, 1, H, W)
    err = float(jnp.max(jnp.abs(out.astype(jnp.float32) - ref)))
    assert err < 1e-4, f"test1 max abs err {err}"

    # Test 2: ragged channel count (C % tile != 0 -> masked tail) and a
    # spatial size that is not a multiple of 128 (full-extent lane block).
    B2, C2, H2, W2 = 1, 13, 8, 24
    x2 = jax.random.normal(k3, (B2, C2, H2, W2), dtype=jnp.float32)
    out2 = jax.block_until_ready(spatial_attention(x2, w_conv))
    ref2 = _reference(x2, w_conv)
    assert out2.shape == (B2, 1, H2, W2)
    err2 = float(jnp.max(jnp.abs(out2.astype(jnp.float32) - ref2)))
    assert err2 < 1e-4, f"test2 max abs err {err2}"

    print("KERNEL_OK")
</pallas_src>

<mosaic_0001>
module attributes {stable_mosaic.version = 11 : i64} {
  func.func @_channel_reduce_kernel(%arg0: i32, %arg1: i32, %arg2: i32, %arg3: memref<1x8x128xf32, #tpu.memory_space<vmem>>, %arg4: memref<1x2x128xf32, #tpu.memory_space<vmem>>, %arg5: memref<1x128xf32, #tpu.memory_space<vmem>>, %arg6: memref<1x128xf32, #tpu.memory_space<vmem>>) attributes {dimension_semantics = [#tpu.dimension_semantics<parallel>, #tpu.dimension_semantics<parallel>, #tpu.dimension_semantics<arbitrary>], iteration_bounds = array<i64: 2, 2, 2>, scalar_prefetch = 0 : i64, scratch_operands = 2 : i64, tpu.core_type = #tpu.core_type<tc>, window_params = [{transform_indices = @transform_0, window_bounds = array<i64: 1, 8, 128>}, {transform_indices = @transform_1, window_bounds = array<i64: 1, 2, 128>}]} {
    %c0_i32 = arith.constant 0 : i32
    %0 = arith.cmpi eq, %arg2, %c0_i32 : i32
    %1 = arith.extui %0 : i1 to i32
    %c0_i32_0 = arith.constant 0 : i32
    %2 = arith.cmpi ne, %1, %c0_i32_0 : i32
    scf.if %2 {
      %cst_14 = arith.constant 0.000000e+00 : f32
      %21 = vector.broadcast %cst_14 : f32 to vector<1x128xf32>
      %c0_15 = arith.constant 0 : index
      %c0_16 = arith.constant 0 : index
      %22 = vector.load %arg5[%c0_15, %c0_16] : memref<1x128xf32, #tpu.memory_space<vmem>>, vector<1x128xf32>
      tpu.vector_store %arg5[%c0_15, %c0_16], %21 {strides = array<i32>} : memref<1x128xf32, #tpu.memory_space<vmem>>, vector<1x128xf32>,
      %cst_17 = arith.constant 0xFF800000 : f32
      %23 = vector.broadcast %cst_17 : f32 to vector<1x128xf32>
      %c0_18 = arith.constant 0 : index
      %c0_19 = arith.constant 0 : index
      %24 = vector.load %arg6[%c0_18, %c0_19] : memref<1x128xf32, #tpu.memory_space<vmem>>, vector<1x128xf32>
      tpu.vector_store %arg6[%c0_18, %c0_19], %23 {strides = array<i32>} : memref<1x128xf32, #tpu.memory_space<vmem>>, vector<1x128xf32>,
    } else {
    }
    %c0_i32_1 = arith.constant 0 : i32
    %c8_i32 = arith.constant 8 : i32
    %3 = arith.muli %c0_i32_1, %c8_i32 : i32
    %4 = tpu.assume_multiple %3, 8 : i32
    %c0 = arith.constant 0 : index
    %5 = arith.index_cast %4 : i32 to index
    %c0_2 = arith.constant 0 : index
    %6 = vector.load %arg3[%c0, %5, %c0_2] : memref<1x8x128xf32, #tpu.memory_space<vmem>>, vector<1x8x128xf32>
    %7 = vector.shape_cast %6 : vector<1x8x128xf32> to vector<8x128xf32>
    %c0_3 = arith.constant 0 : index
    %c0_4 = arith.constant 0 : index
    %8 = vector.load %arg5[%c0_3, %c0_4] : memref<1x128xf32, #tpu.memory_space<vmem>>, vector<1x128xf32>
    %cst = arith.constant dense<0.000000e+00> : vector<128xf32>
    %9 = vector.multi_reduction <add>, %7, %cst [0] : vector<8x128xf32> to vector<128xf32>
    %10 = vector.shape_cast %9 : vector<128xf32> to vector<1x128xf32>
    %11 = arith.addf %8, %10 : vector<1x128xf32>
    %c0_5 = arith.constant 0 : index
    %c0_6 = arith.constant 0 : index
    %12 = vector.load %arg5[%c0_5, %c0_6] : memref<1x128xf32, #tpu.memory_space<vmem>>, vector<1x128xf32>
    tpu.vector_store %arg5[%c0_5, %c0_6], %11 {strides = array<i32>} : memref<1x128xf32, #tpu.memory_space<vmem>>, vector<1x128xf32>,
    %c0_7 = arith.constant 0 : index
    %c0_8 = arith.constant 0 : index
    %13 = vector.load %arg6[%c0_7, %c0_8] : memref<1x128xf32, #tpu.memory_space<vmem>>, vector<1x128xf32>
    %cst_9 = arith.constant dense<0xFF800000> : vector<128xf32>
    %14 = vector.multi_reduction <maximumf>, %7, %cst_9 [0] : vector<8x128xf32> to vector<128xf32>
    %15 = vector.shape_cast %14 : vector<128xf32> to vector<1x128xf32>
    %16 = arith.maximumf %13, %15 : vector<1x128xf32>
    %c0_10 = arith.constant 0 : index
    %c0_11 = arith.constant 0 : index
    %17 = vector.load %arg6[%c0_10, %c0_11] : memref<1x128xf32, #tpu.memory_space<vmem>>, vector<1x128xf32>
    tpu.vector_store %arg6[%c0_10, %c0_11], %16 {strides = array<i32>} : memref<1x128xf32, #tpu.memory_space<vmem>>, vector<1x128xf32>,
    %c1_i32 = arith.constant 1 : i32
    %c1_i32_12 = arith.constant 1 : i32
    %18 = arith.cmpi eq, %arg2, %c1_i32_12 : i32
    %19 = arith.extui %18 : i1 to i32
    %c0_i32_13 = arith.constant 0 : i32
    %20 = arith.cmpi ne, %19, %c0_i32_13 : i32
    scf.if %20 {
      %c0_14 = arith.constant 0 : index
      %c0_15 = arith.constant 0 : index
      %21 = vector.load %arg5[%c0_14, %c0_15] : memref<1x128xf32, #tpu.memory_space<vmem>>, vector<1x128xf32>
      %22 = vector.shape_cast %21 : vector<1x128xf32> to vector<128xf32>
      %cst_16 = arith.constant 6.250000e-02 : f32
      %23 = vector.broadcast %cst_16 : f32 to vector<128xf32>
      %24 = arith.mulf %22, %23 : vector<128xf32>
      %c0_17 = arith.constant 0 : index
      %c0_18 = arith.constant 0 : index
      %c0_19 = arith.constant 0 : index
      %25 = vector.load %arg4[%c0_17, %c0_18, %c0_19] : memref<1x2x128xf32, #tpu.memory_space<vmem>>, vector<1x1x128xf32>
      %26 = vector.shape_cast %25 : vector<1x1x128xf32> to vector<128xf32>
      %27 = vector.shape_cast %24 : vector<128xf32> to vector<1x1x128xf32>
      tpu.vector_store %arg4[%c0_17, %c0_18, %c0_19], %27 {strides = array<i32>} : memref<1x2x128xf32, #tpu.memory_space<vmem>>, vector<1x1x128xf32>,
      %c0_20 = arith.constant 0 : index
      %c0_21 = arith.constant 0 : index
      %28 = vector.load %arg6[%c0_20, %c0_21] : memref<1x128xf32, #tpu.memory_space<vmem>>, vector<1x128xf32>
      %29 = vector.shape_cast %28 : vector<1x128xf32> to vector<128xf32>
      %c0_22 = arith.constant 0 : index
      %c1 = arith.constant 1 : index
      %c0_23 = arith.constant 0 : index
      %30 = vector.load %arg4[%c0_22, %c1, %c0_23] : memref<1x2x128xf32, #tpu.memory_space<vmem>>, vector<1x1x128xf32>
      %31 = vector.shape_cast %30 : vector<1x1x128xf32> to vector<128xf32>
      %32 = vector.shape_cast %29 : vector<128xf32> to vector<1x1x128xf32>
      tpu.vector_store %arg4[%c0_22, %c1, %c0_23], %32 {strides = array<i32>} : memref<1x2x128xf32, #tpu.memory_space<vmem>>, vector<1x1x128xf32>,
    } else {
    }
    return
  }
  func.func @transform_0(%arg0: i32, %arg1: i32, %arg2: i32) -> (i32, i32, i32) {
    %c0_i32 = arith.constant 0 : i32
    return %arg0, %arg2, %arg1 : i32, i32, i32
  }
  func.func @transform_1(%arg0: i32, %arg1: i32, %arg2: i32) -> (i32, i32, i32) {
    %c0_i32 = arith.constant 0 : i32
    %c0_i32_0 = arith.constant 0 : i32
    return %arg0, %c0_i32, %arg1 : i32, i32, i32
  }
}

</mosaic_0001>

<llo_original>
// kernel: tpu_custom_call.1
$region0: #{tpu_custom_call.1}
  #allocation0 [shape = 'u32[]', space=smem, size = 0x4, offset = 0x4, fixed_abs, tag = 'smem constant byte address 0x4 - core index']
  #allocation1 [shape = 'u32[144,128]{1,0:T(1,128)}', space=vmem, size = 0x12000, scoped, tag = 'internal scratch']
  #allocation2 [shape = 'f32[1,128]{1,0:T(1,128)}', space=vmem, size = 0x200, scoped, tag = 'scratch operand']
  #allocation3 [shape = 'f32[1,128]{1,0:T(1,128)}', space=vmem, size = 0x200, scoped, tag = 'scratch operand']
  %s0 = inlined_call_operand.hbm [shape: f32[2,16,256], index: 0, kind: input, shape index: {}]
  %s1 = inlined_call_operand.hbm [shape: f32[2,2,256], index: 1, kind: output, shape index: {}]
  %s2 = sld [smem:[#allocation0]]
  $region49: #{tpu_custom_call.1} parent=0
    _
  %s4 = ssub.s32 1, %s2
  %s5 = scalar_select 0, %s4, %s2
  $region1: #{tpu_custom_call.1} parent=0
    #allocation4 [shape = 'u8[8192]{0}', space=vmem, size = 0x2000, scoped, tag = 'input window, operand 0']
    #allocation5 [shape = 's32[2]{0}', space=sflag, size = 0x8, scoped, tag = 'scoped memory for tpu_custom_call.1']
    #allocation6 [shape = 's32[2]{0}', space=sflag, size = 0x8, scoped, tag = 'scoped memory for tpu_custom_call.1']
    #allocation7 [shape = 'u8[2048]{0}', space=vmem, size = 0x800, scoped, tag = 'output window, operand 0']
    %6 = vsyncpa [#allocation5], 0
    %s7 = scalar_lea.sflag [#allocation5], 1
    %8 = vsyncpa %s7, 0
    %9 = vsyncpa [#allocation6], 0
    %s10 = scalar_lea.sflag [#allocation6], 1
    %11 = vsyncpa %s10, 0
    loop: start=0, step=1, limit=10
    $region2: #{tpu_custom_call.1} parent=1 // loop_pre_header
      _
    $region3: #{tpu_custom_call.1} parent=1 // loop_header
      %s13 = sphi 0, %s17
      %p14 = scmp.ge.s32.totalorder %s13, 10
      %s20 = sphi 0, %s39
      %s21 = sphi 0, %s35
      %s22 = sphi 0, %s31
      %s23 = sphi 0, %s20
      %s24 = sphi 0, %s21
      %s25 = sphi 0, %s22
      %s26 = sphi 0, %s23
      %s27 = sphi 0, %s24
      %s28 = sphi 0, %s25
      %s46 = sphi 0, %s48
      %s49 = sphi 0, %s46
      %s50 = sphi 0, %s49
      %s66 = sphi 0, %s50
      %s74 = sphi 0, %s76
      %s77 = sphi 0, %s74
      %s78 = sphi 0, %s77
      %s94 = sphi 0, %s78
    $region4: #{tpu_custom_call.1} parent=1 // loop_header_branch
      %16 = sbr.rel (%p14) target = $region8
    $region5: #{tpu_custom_call.1} parent=1 // loop_body
      %s18 = ssub.s32 %s13, 1
      %s19 = ssub.s32 %s13, 2
      %s29 = sadd.s32 1, %s22
      %p30 = scmp.ge.s32.totalorder %s29, 2
      %s31 = scalar_select %p30, 0, %s29
      %s32 = sadd.s32 1, %s21
      %s33 = scalar_select %p30, %s32, %s21
      %p34 = scmp.ge.s32.totalorder %s33, 2
      %s35 = scalar_select %p34, 0, %s33
      %s36 = sadd.s32 1, %s20
      %s37 = scalar_select %p34, %s36, %s20
      %p38 = scmp.ge.s32.totalorder %s37, 2
      %s39 = scalar_select %p38, 0, %s37
      %s40 = ssub.s32 %s20, %s39
      %s41 = ssub.s32 %s22, %s31
      %s42 = sor.u32 %s40, %s41
      %s43 = ssub.s32 %s21, %s35
      %s44 = sor.u32 %s42, %s43
      %p45 = scmp.eq.s32.totalorder %s44, 0
      %s47 = sadd.s32 %s46, 1
      %s48 = scalar_select %p45, %s46, %s47
      %p51 = pneg %p45
      %p52 = scmp.eq.s32.totalorder %s13, 7
      %p53 = por %p51, %p52
      %p54 = scmp.ne.s32.totalorder %s46, %s49
      %p55 = scmp.eq.s32.totalorder %s13, 0
      %p56 = por %p54, %p55
      %p57 = scmp.ne.s32.totalorder %s46, %s49
      %p58 = scmp.eq.s32.totalorder %s18, 7
      %p59 = por %p57, %p58
      %p60 = scmp.ne.s32.totalorder %s49, %s50
      %p61 = scmp.eq.s32.totalorder %s18, 0
      %p62 = por %p60, %p61
      %p63 = scmp.ne.s32.totalorder %s49, %s50
      %p64 = scmp.eq.s32.totalorder %s19, 7
      %p65 = por %p63, %p64
      %p67 = scmp.ne.s32.totalorder %s50, %s66
      %p68 = scmp.eq.s32.totalorder %s19, 0
      %p69 = por %p67, %p68
      %s70 = ssub.s32 %s20, %s39
      %s71 = ssub.s32 %s21, %s35
      %s72 = sor.u32 %s70, %s71
      %p73 = scmp.eq.s32.totalorder %s72, 0
      %s75 = sadd.s32 %s74, 1
      %s76 = scalar_select %p73, %s74, %s75
      %p79 = pneg %p73
      %p80 = scmp.eq.s32.totalorder %s13, 7
      %p81 = por %p79, %p80
      %p82 = scmp.ne.s32.totalorder %s74, %s77
      %p83 = scmp.eq.s32.totalorder %s13, 0
      %p84 = por %p82, %p83
      %p85 = scmp.ne.s32.totalorder %s74, %s77
      %p86 = scmp.eq.s32.totalorder %s18, 7
      %p87 = por %p85, %p86
      %p88 = scmp.ne.s32.totalorder %s77, %s78
      %p89 = scmp.eq.s32.totalorder %s18, 0
      %p90 = por %p88, %p89
      %p91 = scmp.ne.s32.totalorder %s77, %s78
      %p92 = scmp.eq.s32.totalorder %s19, 7
      %p93 = por %p91, %p92
      %p95 = scmp.ne.s32.totalorder %s78, %s94
      %p96 = scmp.eq.s32.totalorder %s19, 0
      %p97 = por %p95, %p96
      %p98 = scmp.le.s32.totalorder 1, %s13
      %p99 = scmp.lt.s32.totalorder %s13, 9
      %p100 = pnand %p98, %p99
      %p101 = pneg %p100
      // Predicated region
      $region9: #{tpu_custom_call.1} parent=5 // pred_check
        _
      $region10: #{tpu_custom_call.1} parent=5 // pred_check_branch
        %103 = sbr.rel (%p100) target = $region12
      $region11: #{tpu_custom_call.1} parent=5 // pred_region
        %s104 = ssub.s32 %s13, 1
      $region12: #{tpu_custom_call.1} parent=5 // pred_fallthru
        _
      %p105 = scmp.lt.s32.totalorder %s13, 8
      // Predicated region
      $region13: #{tpu_custom_call.1} parent=5 // pred_check
        %p106 = pneg %p105
      $region14: #{tpu_custom_call.1} parent=5 // pred_check_branch
        %108 = sbr.rel (%p106) target = $region16
      $region15: #{tpu_custom_call.1} parent=5 // pred_region
        // Predicated region
        $region17: #{tpu_custom_call.1} parent=15 // pred_check
          %p109 = pneg %p56
        $region18: #{tpu_custom_call.1} parent=15 // pred_check_branch
          %111 = sbr.rel (%p109) target = $region20
        $region19: #{tpu_custom_call.1} parent=15 // pred_region
          %s112 = sand.u32 %s46, 1
          %s113 = scalar_lea.sflag [#allocation5], %s112
          %s114 = sand.u32 %s46, 1
          %s115 = smul.addr %s114, 8
          %s116 = scalar_lea.vmem [#allocation4], %s115
          %s118 = ssub.s32 128, 128
          %119 = vsyncadd %s113, %s118
          %s120 = smul.addr %s22, 2
          %s121 = sadd.s32 %s21, %s120
          %s122 = smul.addr %s20, 4
          %s123 = sadd.s32 %s121, %s122
          %s124 = smul.addr %s123, 128
          %s125 = scalar_lea.hbm %s0, %s124
          %s127 = sshll.u32 %s116, 4
          %s128 = int_to_ptr.vmem [resolvable:$true] %s127
          %130 = dma.hbm_to_vmem [thread:$0]  %s125, 128, %s128, %s113
        $region20: #{tpu_custom_call.1} parent=15 // pred_fallthru
          _
      $region16: #{tpu_custom_call.1} parent=5 // pred_fallthru
        _
      %p131 = scmp.le.s32.totalorder 1, %s13
      %p132 = scmp.lt.s32.totalorder %s13, 9
      %p133 = pnand %p131, %p132
      %p134 = pneg %p133
      // Predicated region
      $region21: #{tpu_custom_call.1} parent=5 // pred_check
        _
      $region22: #{tpu_custom_call.1} parent=5 // pred_check_branch
        %136 = sbr.rel (%p133) target = $region24
      $region23: #{tpu_custom_call.1} parent=5 // pred_region
        %s137 = ssub.s32 %s13, 1
        %s138 = sand.u32 %s49, 1
        %s139 = scalar_lea.sflag [#allocation5], %s138
        %s140 = sand.u32 %s49, 1
        %s141 = smul.addr %s140, 8
        %s142 = scalar_lea.vmem [#allocation4], %s141
        // Predicated region
        $region25: #{tpu_custom_call.1} parent=23 // pred_check
          %p143 = pneg %p62
        $region26: #{tpu_custom_call.1} parent=23 // pred_check_branch
          %145 = sbr.rel (%p143) target = $region28
        $region27: #{tpu_custom_call.1} parent=23 // pred_region
          %146 = dma.done %s139, 128
        $region28: #{tpu_custom_call.1} parent=23 // pred_fallthru
          _
        %s147 = sand.u32 %s49, 1
        %s148 = scalar_lea.sflag [#allocation5], %s147
        %s149 = sand.u32 %s49, 1
        %s150 = smul.addr %s149, 8
        %s151 = scalar_lea.vmem [#allocation4], %s150
        %p152 = pneg %p62
        %p153 = pneg %p59
        %p154 = pneg %p90
        %p155 = pneg %p87
        %s156 = sand.u32 %s77, 1
        %s157 = scalar_lea.sflag [#allocation6], %s156
        %s158 = sand.u32 %s77, 1
        %s159 = smul.addr %s158, 2
        %s160 = scalar_lea.vmem [#allocation7], %s159
        %p161 = scmp.eq.s32.totalorder %s25, 0
        // Predicated region
        $region29: #{tpu_custom_call.1} parent=23 // pred_check
          %p162 = pneg %p161
        $region30: #{tpu_custom_call.1} parent=23 // pred_check_branch
          %164 = sbr.rel (%p162) target = $region32
        $region31: #{tpu_custom_call.1} parent=23 // pred_region
          %165 = vst [vmem:[#allocation2] sm:$0x1] 0.0
          %166 = vst [vmem:[#allocation3] sm:$0x1] -inf
        $region32: #{tpu_custom_call.1} parent=23 // pred_fallthru
          _
        %v167 = vld [vmem:[%s142] sm:$0xff]
        %v168 = vld [vmem:[#allocation2] sm:$0x1]
        %v169 = vrot.slane %v167, 4
        %v170 = vadd.f32 %v167, %v169
        %v171 = vrot.slane %v170, 2
        %v172 = vadd.f32 %v170, %v171
        %v173 = vrot.slane %v172, 1
        %v174 = vadd.f32 %v172, %v173
        %v175 = vadd.f32 %v168, %v174
        %176 = vst [vmem:[#allocation2] sm:$0x1] %v175
        %v177 = vld [vmem:[#allocation3] sm:$0x1]
        %v178 = vrot.slane %v167, 4
        %v179 = vmax.f32 %v167, %v178
        %v180 = vrot.slane %v179, 2
        %v181 = vmax.f32 %v179, %v180
        %v182 = vrot.slane %v181, 1
        %v183 = vmax.f32 %v181, %v182
        %v184 = vmax.f32 %v177, %v183
        %185 = vst [vmem:[#allocation3] sm:$0x1] %v184
        %p186 = scmp.eq.s32.totalorder %s25, 1
        // Predicated region
        $region33: #{tpu_custom_call.1} parent=23 // pred_check
          %p187 = pneg %p186
        $region34: #{tpu_custom_call.1} parent=23 // pred_check_branch
          %189 = sbr.rel (%p187) target = $region36
        $region35: #{tpu_custom_call.1} parent=23 // pred_region
          %v190 = vld [vmem:[#allocation2] sm:$0x1]
          %v191 = vmul.f32 %v190, 0.0625
          %192 = vst [vmem:[%s160] sm:$0x1] %v191
          %v193 = vld [vmem:[#allocation3] sm:$0x1]
          %194 = vst [vmem:[%s160 + $0x1] sm:$0x1] %v193
        $region36: #{tpu_custom_call.1} parent=23 // pred_fallthru
          _
        %s195 = sand.u32 %s77, 1
        %s196 = scalar_lea.sflag [#allocation6], %s195
        %s197 = sand.u32 %s77, 1
        %s198 = smul.addr %s197, 2
        %s199 = scalar_lea.vmem [#allocation7], %s198
        // Predicated region
        $region37: #{tpu_custom_call.1} parent=23 // pred_check
          %p200 = pneg %p87
        $region38: #{tpu_custom_call.1} parent=23 // pred_check_branch
          %202 = sbr.rel (%p200) target = $region40
        $region39: #{tpu_custom_call.1} parent=23 // pred_region
          %s204 = ssub.s32 32, 32
          %205 = vsyncadd %s196, %s204
          %s206 = smul.addr %s23, 2
          %s207 = sadd.s32 %s24, %s206
          %s208 = smul.addr %s207, 32
          %s209 = scalar_lea.hbm %s1, %s208
          %s211 = sshll.u32 %s199, 4
          %s212 = int_to_ptr.vmem [resolvable:$true] %s211
          %214 = dma.vmem_to_hbm [thread:$0]  %s212, 32, %s209, %s196
        $region40: #{tpu_custom_call.1} parent=23 // pred_fallthru
          _
      $region24: #{tpu_custom_call.1} parent=5 // pred_fallthru
        _
      %p215 = scmp.le.s32.totalorder 2, %s13
      // Predicated region
      $region41: #{tpu_custom_call.1} parent=5 // pred_check
        %p216 = pneg %p215
      $region42: #{tpu_custom_call.1} parent=5 // pred_check_branch
        %218 = sbr.rel (%p216) target = $region44
      $region43: #{tpu_custom_call.1} parent=5 // pred_region
        %s219 = ssub.s32 %s13, 2
        // Predicated region
        $region45: #{tpu_custom_call.1} parent=43 // pred_check
          %p220 = pneg %p93
        $region46: #{tpu_custom_call.1} parent=43 // pred_check_branch
          %222 = sbr.rel (%p220) target = $region48
        $region47: #{tpu_custom_call.1} parent=43 // pred_region
          %s223 = sand.u32 %s78, 1
          %s224 = scalar_lea.sflag [#allocation6], %s223
          %s225 = sand.u32 %s78, 1
          %s226 = smul.addr %s225, 2
          %s227 = scalar_lea.vmem [#allocation7], %s226
          %228 = dma.done %s224, 32
        $region48: #{tpu_custom_call.1} parent=43 // pred_fallthru
          _
      $region44: #{tpu_custom_call.1} parent=5 // pred_fallthru
        _
    $region6: #{tpu_custom_call.1} parent=1 // loop_footer
      %s17 = sadd.s32 1, %s13
    $region7: #{tpu_custom_call.1} parent=1 // loop_footer_branch
      %12 = sbr.rel target = $region3
    $region8: #{tpu_custom_call.1} parent=1 // loop_exit
      _
    %229 = vsyncpa [#allocation5], 1
    %s230 = scalar_lea.sflag [#allocation5], 1
    %231 = vsyncpa %s230, 1
    %232 = vsyncpa [#allocation6], 1
    %s233 = scalar_lea.sflag [#allocation6], 1
    %234 = vsyncpa %s233, 1

</llo_original>
